<compile_context>
chip_gen: v7x
topology: tpu7x:2x2x1
jax: 0.10.0
libtpu: 0.0.40
codegen_flags: <defaults>
</compile_context>

<pallas_src>
import functools

import jax
import jax.numpy as jnp
from jax.experimental import pallas as pl
from jax.experimental.pallas import tpu as pltpu

_EPS = 1e-6  # torch pairwise_distance default eps (added to the difference)


def _myloss_kernel(anchor_ref, pos_ref, neg_ref, neg2_ref, pos2_ref, sigma_ref,
                   loss_ref, *, batch, margin1, margin2):
    anchor = anchor_ref[...]                                       # (B, D)
    pos = pos_ref[...]
    neg = neg_ref[...]
    neg2 = neg2_ref[...]
    pos2 = pos2_ref[...]

    def dist(a, b):
        d = a - b + _EPS
        return jnp.sqrt(jnp.sum(d * d, axis=1, keepdims=True))    # (B, 1)

    d1_pos = dist(neg, neg2)      # ||neg - neg2||
    d1_neg = dist(neg, anchor)    # ||neg - anchor||
    d2_pos = dist(pos, pos2)      # ||pos - pos2||
    d2_neg = dist(pos, anchor)    # ||pos - anchor||

    inv_b = 1.0 / batch           # compile-time constant, no runtime divide
    loss1 = jnp.sum(jnp.maximum(d1_pos - d1_neg + margin1, 0.0),
                    axis=0, keepdims=True) * inv_b                 # (1, 1)
    loss2 = jnp.sum(jnp.maximum(d2_pos - d2_neg + margin2, 0.0),
                    axis=0, keepdims=True) * inv_b                 # (1, 1)

    # Stable softplus on both sigmas at once:  max(x,0) + log(1 + exp(-|x|)).
    sig = sigma_ref[...]                                           # (1, 2)
    s = jnp.maximum(sig, 0.0) + jnp.log(1.0 + jnp.exp(-jnp.abs(sig)))

    # 1/(2*s^2) via approx reciprocal (single EUP op in a free slot).
    w = 0.5 * pl.reciprocal(s * s, approx=True)                    # (1, 2)
    w0 = w[:, 0:1]
    w1 = w[:, 1:2]
    reg = jnp.log(s[:, 0:1] * s[:, 1:2])                           # (1, 1)

    loss_ref[...] = w0 * loss1 + w1 * loss2 + reg                  # (1, 1)


def myloss_forward(embed_anchor, embed_pos, embed_neg, embed_neg2, embed_pos2,
                   sigma_weight, *, margin1, margin2):
    B, D = embed_anchor.shape
    f32 = jnp.float32

    # sigma_weight (2,1) -> lane-dense (1,2): [s0, s1] along the lane axis.
    sig = sigma_weight.reshape(1, 2).astype(f32)

    kernel = functools.partial(_myloss_kernel, batch=B,
                               margin1=float(margin1), margin2=float(margin2))
    cost = pl.CostEstimate(
        flops=14 * B * D + 64,
        transcendentals=4 * B + 8,
        bytes_accessed=5 * B * D * 4 + 2 * 4 + 4,
    )
    vmem = pltpu.MemorySpace.VMEM
    loss = pl.pallas_call(
        kernel,
        out_shape=jax.ShapeDtypeStruct((1, 1), f32),
        in_specs=[pl.BlockSpec(memory_space=vmem)] * 6,
        out_specs=pl.BlockSpec(memory_space=vmem),
        cost_estimate=cost,
    )(embed_anchor.astype(f32), embed_pos.astype(f32), embed_neg.astype(f32),
      embed_neg2.astype(f32), embed_pos2.astype(f32), sig)
    return loss.reshape(1)  # matches the torch module's output shape (1,)


def _myloss_ref(anchor, pos, neg, neg2, pos2, sigma_weight, margin1, margin2):
    def dist(a, b):
        return jnp.sqrt(jnp.sum((a - b + _EPS) ** 2, axis=1))
    l1 = jnp.mean(jnp.maximum(dist(neg, neg2) - dist(neg, anchor) + margin1, 0.0))
    l2 = jnp.mean(jnp.maximum(dist(pos, pos2) - dist(pos, anchor) + margin2, 0.0))
    s0 = jax.nn.softplus(sigma_weight[0, 0])
    s1 = jax.nn.softplus(sigma_weight[1, 0])
    return 1.0 / (2.0 * s0 ** 2) * l1 + 1.0 / (2.0 * s1 ** 2) * l2 + jnp.log(s0 * s1)


if __name__ == "__main__":
    # Small shapes consistent with the module: batch=8, embedding dim=128.
    B, D = 8, 128
    margin1, margin2 = 1.0, 2.0

    key = jax.random.PRNGKey(0)
    ks = jax.random.split(key, 6)
    anchor = jax.random.normal(ks[0], (B, D), jnp.float32)
    pos    = jax.random.normal(ks[1], (B, D), jnp.float32)
    neg    = jax.random.normal(ks[2], (B, D), jnp.float32)
    neg2   = jax.random.normal(ks[3], (B, D), jnp.float32)
    pos2   = jax.random.normal(ks[4], (B, D), jnp.float32)

    # xavier_uniform_ on a (2,1) parameter: U(-sqrt(6/(1+2)), +sqrt(6/(1+2)))
    bound = (6.0 / 3.0) ** 0.5
    sigma_weight = jax.random.uniform(ks[5], (2, 1), jnp.float32, -bound, bound)

    loss = myloss_forward(anchor, pos, neg, neg2, pos2, sigma_weight,
                          margin1=margin1, margin2=margin2)
    jax.block_until_ready(loss)

    ref = _myloss_ref(anchor, pos, neg, neg2, pos2, sigma_weight, margin1, margin2)
    assert loss.shape == (1,)
    assert jnp.allclose(loss[0], ref, rtol=1e-3, atol=1e-5), (loss, ref)
    print("KERNEL_OK")
</pallas_src>

<mosaic_0001>
module attributes {stable_mosaic.version = 11 : i64} {
  func.func @_myloss_kernel(%arg0: memref<8x128xf32, #tpu.memory_space<vmem>>, %arg1: memref<8x128xf32, #tpu.memory_space<vmem>>, %arg2: memref<8x128xf32, #tpu.memory_space<vmem>>, %arg3: memref<8x128xf32, #tpu.memory_space<vmem>>, %arg4: memref<8x128xf32, #tpu.memory_space<vmem>>, %arg5: memref<1x2xf32, #tpu.memory_space<vmem>>, %arg6: memref<1x1xf32, #tpu.memory_space<vmem>>) attributes {dimension_semantics = [], scalar_prefetch = 0 : i64, scratch_operands = 0 : i64, tpu.core_type = #tpu.core_type<tc>} {
    %c0 = arith.constant 0 : index
    %c0_0 = arith.constant 0 : index
    %0 = vector.load %arg0[%c0, %c0_0] : memref<8x128xf32, #tpu.memory_space<vmem>>, vector<8x128xf32>
    %c0_1 = arith.constant 0 : index
    %c0_2 = arith.constant 0 : index
    %1 = vector.load %arg1[%c0_1, %c0_2] : memref<8x128xf32, #tpu.memory_space<vmem>>, vector<8x128xf32>
    %c0_3 = arith.constant 0 : index
    %c0_4 = arith.constant 0 : index
    %2 = vector.load %arg2[%c0_3, %c0_4] : memref<8x128xf32, #tpu.memory_space<vmem>>, vector<8x128xf32>
    %c0_5 = arith.constant 0 : index
    %c0_6 = arith.constant 0 : index
    %3 = vector.load %arg3[%c0_5, %c0_6] : memref<8x128xf32, #tpu.memory_space<vmem>>, vector<8x128xf32>
    %c0_7 = arith.constant 0 : index
    %c0_8 = arith.constant 0 : index
    %4 = vector.load %arg4[%c0_7, %c0_8] : memref<8x128xf32, #tpu.memory_space<vmem>>, vector<8x128xf32>
    %5 = arith.subf %2, %3 : vector<8x128xf32>
    %cst = arith.constant 9.99999997E-7 : f32
    %6 = vector.broadcast %cst : f32 to vector<8x128xf32>
    %7 = arith.addf %5, %6 : vector<8x128xf32>
    %8 = arith.mulf %7, %7 : vector<8x128xf32>
    %cst_9 = arith.constant dense<0.000000e+00> : vector<8xf32>
    %9 = vector.multi_reduction <add>, %8, %cst_9 [1] : vector<8x128xf32> to vector<8xf32>
    %10 = vector.shape_cast %9 : vector<8xf32> to vector<8x1xf32>
    %11 = math.sqrt %10 : vector<8x1xf32>
    %12 = arith.subf %2, %0 : vector<8x128xf32>
    %cst_10 = arith.constant 9.99999997E-7 : f32
    %13 = vector.broadcast %cst_10 : f32 to vector<8x128xf32>
    %14 = arith.addf %12, %13 : vector<8x128xf32>
    %15 = arith.mulf %14, %14 : vector<8x128xf32>
    %cst_11 = arith.constant dense<0.000000e+00> : vector<8xf32>
    %16 = vector.multi_reduction <add>, %15, %cst_11 [1] : vector<8x128xf32> to vector<8xf32>
    %17 = vector.shape_cast %16 : vector<8xf32> to vector<8x1xf32>
    %18 = math.sqrt %17 : vector<8x1xf32>
    %19 = arith.subf %1, %4 : vector<8x128xf32>
    %cst_12 = arith.constant 9.99999997E-7 : f32
    %20 = vector.broadcast %cst_12 : f32 to vector<8x128xf32>
    %21 = arith.addf %19, %20 : vector<8x128xf32>
    %22 = arith.mulf %21, %21 : vector<8x128xf32>
    %cst_13 = arith.constant dense<0.000000e+00> : vector<8xf32>
    %23 = vector.multi_reduction <add>, %22, %cst_13 [1] : vector<8x128xf32> to vector<8xf32>
    %24 = vector.shape_cast %23 : vector<8xf32> to vector<8x1xf32>
    %25 = math.sqrt %24 : vector<8x1xf32>
    %26 = arith.subf %1, %0 : vector<8x128xf32>
    %cst_14 = arith.constant 9.99999997E-7 : f32
    %27 = vector.broadcast %cst_14 : f32 to vector<8x128xf32>
    %28 = arith.addf %26, %27 : vector<8x128xf32>
    %29 = arith.mulf %28, %28 : vector<8x128xf32>
    %cst_15 = arith.constant dense<0.000000e+00> : vector<8xf32>
    %30 = vector.multi_reduction <add>, %29, %cst_15 [1] : vector<8x128xf32> to vector<8xf32>
    %31 = vector.shape_cast %30 : vector<8xf32> to vector<8x1xf32>
    %32 = math.sqrt %31 : vector<8x1xf32>
    %33 = arith.subf %11, %18 : vector<8x1xf32>
    %cst_16 = arith.constant 1.000000e+00 : f32
    %34 = vector.broadcast %cst_16 : f32 to vector<8x1xf32>
    %35 = arith.addf %33, %34 : vector<8x1xf32>
    %cst_17 = arith.constant 0.000000e+00 : f32
    %36 = vector.broadcast %cst_17 : f32 to vector<8x1xf32>
    %37 = arith.maximumf %35, %36 : vector<8x1xf32>
    %cst_18 = arith.constant dense<0.000000e+00> : vector<1xf32>
    %38 = vector.multi_reduction <add>, %37, %cst_18 [0] : vector<8x1xf32> to vector<1xf32>
    %39 = vector.shape_cast %38 : vector<1xf32> to vector<1x1xf32>
    %cst_19 = arith.constant 1.250000e-01 : f32
    %40 = vector.broadcast %cst_19 : f32 to vector<1x1xf32>
    %41 = arith.mulf %39, %40 : vector<1x1xf32>
    %42 = arith.subf %25, %32 : vector<8x1xf32>
    %cst_20 = arith.constant 2.000000e+00 : f32
    %43 = vector.broadcast %cst_20 : f32 to vector<8x1xf32>
    %44 = arith.addf %42, %43 : vector<8x1xf32>
    %cst_21 = arith.constant 0.000000e+00 : f32
    %45 = vector.broadcast %cst_21 : f32 to vector<8x1xf32>
    %46 = arith.maximumf %44, %45 : vector<8x1xf32>
    %cst_22 = arith.constant dense<0.000000e+00> : vector<1xf32>
    %47 = vector.multi_reduction <add>, %46, %cst_22 [0] : vector<8x1xf32> to vector<1xf32>
    %48 = vector.shape_cast %47 : vector<1xf32> to vector<1x1xf32>
    %cst_23 = arith.constant 1.250000e-01 : f32
    %49 = vector.broadcast %cst_23 : f32 to vector<1x1xf32>
    %50 = arith.mulf %48, %49 : vector<1x1xf32>
    %c0_24 = arith.constant 0 : index
    %c0_25 = arith.constant 0 : index
    %51 = vector.load %arg5[%c0_24, %c0_25] : memref<1x2xf32, #tpu.memory_space<vmem>>, vector<1x2xf32>
    %cst_26 = arith.constant 0.000000e+00 : f32
    %52 = vector.broadcast %cst_26 : f32 to vector<1x2xf32>
    %53 = arith.maximumf %51, %52 : vector<1x2xf32>
    %54 = math.absf %51 : vector<1x2xf32>
    %cst_27 = arith.constant 0.000000e+00 : f32
    %55 = vector.broadcast %cst_27 : f32 to vector<1x2xf32>
    %56 = arith.subf %55, %54 : vector<1x2xf32>
    %57 = math.exp %56 : vector<1x2xf32>
    %cst_28 = arith.constant 1.000000e+00 : f32
    %58 = vector.broadcast %cst_28 : f32 to vector<1x2xf32>
    %59 = arith.addf %58, %57 : vector<1x2xf32>
    %60 = math.log %59 : vector<1x2xf32>
    %61 = arith.addf %53, %60 : vector<1x2xf32>
    %62 = arith.mulf %61, %61 : vector<1x2xf32>
    %63 = tpu.reciprocal %62 {approx = true} : vector<1x2xf32> -> vector<1x2xf32>
    %cst_29 = arith.constant 5.000000e-01 : f32
    %64 = vector.broadcast %cst_29 : f32 to vector<1x2xf32>
    %65 = arith.mulf %64, %63 : vector<1x2xf32>
    %66 = vector.extract_strided_slice %65 {offsets = [0, 0], sizes = [1, 1], strides = [1, 1]} : vector<1x2xf32> to vector<1x1xf32>
    %67 = vector.extract_strided_slice %65 {offsets = [0, 1], sizes = [1, 1], strides = [1, 1]} : vector<1x2xf32> to vector<1x1xf32>
    %68 = vector.extract_strided_slice %61 {offsets = [0, 0], sizes = [1, 1], strides = [1, 1]} : vector<1x2xf32> to vector<1x1xf32>
    %69 = vector.extract_strided_slice %61 {offsets = [0, 1], sizes = [1, 1], strides = [1, 1]} : vector<1x2xf32> to vector<1x1xf32>
    %70 = arith.mulf %68, %69 : vector<1x1xf32>
    %71 = math.log %70 : vector<1x1xf32>
    %72 = arith.mulf %66, %41 : vector<1x1xf32>
    %73 = arith.mulf %67, %50 : vector<1x1xf32>
    %74 = arith.addf %72, %73 : vector<1x1xf32>
    %75 = arith.addf %74, %71 : vector<1x1xf32>
    %c0_30 = arith.constant 0 : index
    %c0_31 = arith.constant 0 : index
    %76 = vector.load %arg6[%c0_30, %c0_31] : memref<1x1xf32, #tpu.memory_space<vmem>>, vector<1x1xf32>
    tpu.vector_store %arg6[%c0_30, %c0_31], %75 {strides = array<i32>} : memref<1x1xf32, #tpu.memory_space<vmem>>, vector<1x1xf32>,
    return
  }
}

</mosaic_0001>

<llo_original>
// kernel: tpu_custom_call.1
$region0: #{tpu_custom_call.1}
  #allocation0 [shape = 'u32[]', space=smem, size = 0x4, offset = 0x4, fixed_abs, tag = 'smem constant byte address 0x4 - core index']
  #allocation1 [shape = 'u32[144,128]{1,0:T(1,128)}', space=vmem, size = 0x12000, scoped, tag = 'internal scratch']
  %s0 = inlined_call_operand.hbm [shape: f32[8,128], index: 0, kind: input, shape index: {}]
  %s1 = inlined_call_operand.hbm [shape: f32[8,128], index: 1, kind: input, shape index: {}]
  %s2 = inlined_call_operand.hbm [shape: f32[8,128], index: 2, kind: input, shape index: {}]
  %s3 = inlined_call_operand.vmem [shape: f32[8,128], index: 3, kind: input, shape index: {}]
  %s4 = inlined_call_operand.hbm [shape: f32[8,128], index: 4, kind: input, shape index: {}]
  %s5 = inlined_call_operand.vmem [shape: f32[1,2], index: 5, kind: input, shape index: {}]
  %s6 = inlined_call_operand.hbm [shape: f32[1,1], index: 6, kind: output, shape index: {}]
  %s7 = sld [smem:[#allocation0]]
  $region50: #{tpu_custom_call.1} parent=0
    _
  %s9 = ssub.s32 1, %s7
  %s10 = scalar_select 0, %s9, %s7
  $region1: #{tpu_custom_call.1} parent=0
    #allocation2 [shape = 'u8[4096]{0}', space=vmem, size = 0x1000, scoped, tag = 'input window, operand 0, single buffered']
    #allocation3 [shape = 's32[1]{0}', space=sflag, size = 0x4, scoped, tag = 'scoped memory for tpu_custom_call.1']
    #allocation4 [shape = 's32[1]{0}', space=sflag, size = 0x4, scoped, tag = 'scoped memory for tpu_custom_call.1']
    #allocation5 [shape = 'u8[4096]{0}', space=vmem, size = 0x1000, scoped, tag = 'input window, operand 1, single buffered']
    #allocation6 [shape = 's32[1]{0}', space=sflag, size = 0x4, scoped, tag = 'scoped memory for tpu_custom_call.1']
    #allocation7 [shape = 'u8[4096]{0}', space=vmem, size = 0x1000, scoped, tag = 'input window, operand 2, single buffered']
    #allocation8 [shape = 'u8[4096]{0}', space=vmem, size = 0x1000, scoped, tag = 'input window, operand 4, single buffered']
    #allocation9 [shape = 's32[1]{0}', space=sflag, size = 0x4, scoped, tag = 'scoped memory for tpu_custom_call.1']
    #allocation10 [shape = 'u8[512]{0}', space=vmem, size = 0x400, scoped, tag = 'output window, operand 0, single buffered']
    %11 = vsyncpa [#allocation3], 0
    %12 = vsyncpa [#allocation6], 0
    %13 = vsyncpa [#allocation9], 0
    %14 = vsyncpa [#allocation4], 0
    // Predicated region
    $region2: #{tpu_custom_call.1} parent=1 // pred_check
      _
    $region3: #{tpu_custom_call.1} parent=1 // pred_check_branch
      %16 = sbr.rel (0) target = $region5
    $region4: #{tpu_custom_call.1} parent=1 // pred_region
      %s18 = ssub.s32 128, 128
      %19 = vsyncadd [#allocation3], %s18
      %s21 = sshll.u32 [#allocation2], 4
      %s22 = int_to_ptr.vmem [resolvable:$true] %s21
      %24 = dma.hbm_to_vmem [thread:$0]  %s0, 128, %s22, [#allocation3]
    $region5: #{tpu_custom_call.1} parent=1 // pred_fallthru
      _
    // Predicated region
    $region6: #{tpu_custom_call.1} parent=1 // pred_check
      _
    $region7: #{tpu_custom_call.1} parent=1 // pred_check_branch
      %26 = sbr.rel (0) target = $region9
    $region8: #{tpu_custom_call.1} parent=1 // pred_region
      %s28 = ssub.s32 128, 128
      %29 = vsyncadd [#allocation6], %s28
      %s31 = sshll.u32 [#allocation5], 4
      %s32 = int_to_ptr.vmem [resolvable:$true] %s31
      %34 = dma.hbm_to_vmem [thread:$0]  %s1, 128, %s32, [#allocation6]
    $region9: #{tpu_custom_call.1} parent=1 // pred_fallthru
      _
    // Predicated region
    $region10: #{tpu_custom_call.1} parent=1 // pred_check
      _
    $region11: #{tpu_custom_call.1} parent=1 // pred_check_branch
      %36 = sbr.rel (0) target = $region13
    $region12: #{tpu_custom_call.1} parent=1 // pred_region
      %s38 = ssub.s32 128, 128
      %39 = vsyncadd [#allocation6], %s38
      %s41 = sshll.u32 [#allocation7], 4
      %s42 = int_to_ptr.vmem [resolvable:$true] %s41
      %44 = dma.hbm_to_vmem [thread:$0]  %s2, 128, %s42, [#allocation6]
    $region13: #{tpu_custom_call.1} parent=1 // pred_fallthru
      _
    // Predicated region
    $region14: #{tpu_custom_call.1} parent=1 // pred_check
      _
    $region15: #{tpu_custom_call.1} parent=1 // pred_check_branch
      %46 = sbr.rel (0) target = $region17
    $region16: #{tpu_custom_call.1} parent=1 // pred_region
      _
    $region17: #{tpu_custom_call.1} parent=1 // pred_fallthru
      _
    // Predicated region
    $region18: #{tpu_custom_call.1} parent=1 // pred_check
      _
    $region19: #{tpu_custom_call.1} parent=1 // pred_check_branch
      %48 = sbr.rel (0) target = $region21
    $region20: #{tpu_custom_call.1} parent=1 // pred_region
      %s50 = ssub.s32 128, 128
      %51 = vsyncadd [#allocation9], %s50
      %s53 = sshll.u32 [#allocation8], 4
      %s54 = int_to_ptr.vmem [resolvable:$true] %s53
      %56 = dma.hbm_to_vmem [thread:$0]  %s4, 128, %s54, [#allocation9]
    $region21: #{tpu_custom_call.1} parent=1 // pred_fallthru
      _
    // Predicated region
    $region22: #{tpu_custom_call.1} parent=1 // pred_check
      _
    $region23: #{tpu_custom_call.1} parent=1 // pred_check_branch
      %58 = sbr.rel (0) target = $region25
    $region24: #{tpu_custom_call.1} parent=1 // pred_region
      _
    $region25: #{tpu_custom_call.1} parent=1 // pred_fallthru
      _
    // Predicated region
    $region26: #{tpu_custom_call.1} parent=1 // pred_check
      _
    $region27: #{tpu_custom_call.1} parent=1 // pred_check_branch
      %60 = sbr.rel (0) target = $region29
    $region28: #{tpu_custom_call.1} parent=1 // pred_region
      %61 = dma.done [#allocation3], 128
    $region29: #{tpu_custom_call.1} parent=1 // pred_fallthru
      _
    // Predicated region
    $region30: #{tpu_custom_call.1} parent=1 // pred_check
      _
    $region31: #{tpu_custom_call.1} parent=1 // pred_check_branch
      %63 = sbr.rel (0) target = $region33
    $region32: #{tpu_custom_call.1} parent=1 // pred_region
      %64 = dma.done [#allocation6], 128
    $region33: #{tpu_custom_call.1} parent=1 // pred_fallthru
      _
    // Predicated region
    $region34: #{tpu_custom_call.1} parent=1 // pred_check
      _
    $region35: #{tpu_custom_call.1} parent=1 // pred_check_branch
      %66 = sbr.rel (0) target = $region37
    $region36: #{tpu_custom_call.1} parent=1 // pred_region
      %67 = dma.done [#allocation6], 128
    $region37: #{tpu_custom_call.1} parent=1 // pred_fallthru
      _
    // Predicated region
    $region38: #{tpu_custom_call.1} parent=1 // pred_check
      _
    $region39: #{tpu_custom_call.1} parent=1 // pred_check_branch
      %69 = sbr.rel (0) target = $region41
    $region40: #{tpu_custom_call.1} parent=1 // pred_region
      %70 = dma.done [#allocation9], 128
    $region41: #{tpu_custom_call.1} parent=1 // pred_fallthru
      _
    %v71 = vld [vmem:[#allocation2] sm:$0xff]
    %v72 = vld [vmem:[#allocation5] sm:$0xff]
    %v73 = vld [vmem:[#allocation7] sm:$0xff]
    %v74 = vld [vmem:[%s3] sm:$0xff]
    %v75 = vld [vmem:[#allocation8] sm:$0xff]
    %v76 = vsub.f32 %v73, %v74
    %v77 = vadd.f32 %v76, 1e-06
    %v78 = vmul.f32 %v77, %v77
    %79 = vadd.xlane.f32.xlu0 %v78
    %v80 = vpop.xlane.xlu0 %79
    %v81 = vrsqrt.pop %v80
    %v82 = vmul.f32 %v80, %v81
    %vm83 = vcmp.eq.f32.partialorder %v80, inf
    %v84 = vsel %vm83, %v80, %v82
    %vm85 = vcmp.eq.f32.partialorder %v80, 0.0
    %v86 = vand.u32 %v80, 2147483648
    %v87 = vsel %vm85, %v86, %v84
    %v88 = vsub.f32 %v73, %v71
    %v89 = vadd.f32 %v88, 1e-06
    %v90 = vmul.f32 %v89, %v89
    %91 = vadd.xlane.f32.xlu0 %v90
    %v92 = vpop.xlane.xlu0 %91
    %v93 = vrsqrt.pop %v92
    %v94 = vmul.f32 %v92, %v93
    %vm95 = vcmp.eq.f32.partialorder %v92, inf
    %v96 = vsel %vm95, %v92, %v94
    %vm97 = vcmp.eq.f32.partialorder %v92, 0.0
    %v98 = vand.u32 %v92, 2147483648
    %v99 = vsel %vm97, %v98, %v96
    %v100 = vsub.f32 %v72, %v75
    %v101 = vadd.f32 %v100, 1e-06
    %v102 = vmul.f32 %v101, %v101
    %103 = vadd.xlane.f32.xlu0 %v102
    %v104 = vpop.xlane.xlu0 %103
    %v105 = vrsqrt.pop %v104
    %v106 = vmul.f32 %v104, %v105
    %vm107 = vcmp.eq.f32.partialorder %v104, inf
    %v108 = vsel %vm107, %v104, %v106
    %vm109 = vcmp.eq.f32.partialorder %v104, 0.0
    %v110 = vand.u32 %v104, 2147483648
    %v111 = vsel %vm109, %v110, %v108
    %v112 = vsub.f32 %v72, %v71
    %v113 = vadd.f32 %v112, 1e-06
    %v114 = vmul.f32 %v113, %v113
    %115 = vadd.xlane.f32.xlu0 %v114
    %v116 = vpop.xlane.xlu0 %115
    %v117 = vrsqrt.pop %v116
    %v118 = vmul.f32 %v116, %v117
    %vm119 = vcmp.eq.f32.partialorder %v116, inf
    %v120 = vsel %vm119, %v116, %v118
    %vm121 = vcmp.eq.f32.partialorder %v116, 0.0
    %v122 = vand.u32 %v116, 2147483648
    %v123 = vsel %vm121, %v122, %v120
    %v124 = vsub.f32 %v87, %v99
    %v125 = vadd.f32 %v124, 1.0
    %v126 = vmax.f32 %v125, 0.0
    %v127 = vrot.slane %v126, 4
    %v128 = vadd.f32 %v126, %v127
    %v129 = vrot.slane %v128, 2
    %v130 = vadd.f32 %v128, %v129
    %v131 = vrot.slane %v130, 1
    %v132 = vadd.f32 %v130, %v131
    %v133 = vmul.f32 %v132, 0.125
    %v134 = vsub.f32 %v111, %v123
    %v135 = vadd.f32 %v134, 2.0
    %v136 = vmax.f32 %v135, 0.0
    %v137 = vrot.slane %v136, 4
    %v138 = vadd.f32 %v136, %v137
    %v139 = vrot.slane %v138, 2
    %v140 = vadd.f32 %v138, %v139
    %v141 = vrot.slane %v140, 1
    %v142 = vadd.f32 %v140, %v141
    %v143 = vmul.f32 %v142, 0.125
    %v144 = vld [vmem:[%s5] sm:$0x1]
    %v145 = vmax.f32 %v144, 0.0
    %v146 = vand.u32 2147483647, %v144
    %v147 = vsub.f32 0.0, %v146
    %v148 = vmul.f32 %v147, 1.442695
    %v149 = vpow.pop %v148
    %v150 = vadd.f32 %v149, 1.0
    %v151 = vlog2.pop %v150
    %v152 = vmul.f32 %v151, 0.6931472
    %v153 = vadd.f32 %v145, %v152
    %v154 = vmul.f32 %v153, %v153
    %v155 = vrcp.pop %v154
    %v156 = vmul.f32 %v155, 0.5
    %158 = vrot.lane.b32.xlu0 %v153, 127
    %v159 = vpop.permute.xlu0 %158
    %v161 = vmul.f32 %v153, %v159
    %v162 = vlog2.pop %v161
    %v163 = vmul.f32 %v162, 0.6931472
    %v164 = vmul.f32 %v156, %v133
    %v165 = vmul.f32 %v156, %v143
    %167 = vrot.lane.b32.xlu0 %v165, 127
    %v168 = vpop.permute.xlu0 %167
    %v170 = vadd.f32 %v164, %v168
    %v171 = vadd.f32 %v170, %v163
    %vm172 = vcmask 0
    %173 = vst.msk [vmem:[#allocation10] sm:$0x1] %vm172, %v171
    // Predicated region
    $region42: #{tpu_custom_call.1} parent=1 // pred_check
      _
    $region43: #{tpu_custom_call.1} parent=1 // pred_check_branch
      %175 = sbr.rel (0) target = $region45
    $region44: #{tpu_custom_call.1} parent=1 // pred_region
      %s177 = ssub.s32 16, 16
      %178 = vsyncadd [#allocation4], %s177
      %s180 = sshll.u32 [#allocation10], 4
      %s181 = int_to_ptr.vmem [resolvable:$true] %s180
      %183 = dma.vmem_to_hbm [thread:$0]  %s181, 16, %s6, [#allocation4]
    $region45: #{tpu_custom_call.1} parent=1 // pred_fallthru
      _
    // Predicated region
    $region46: #{tpu_custom_call.1} parent=1 // pred_check
      _
    $region47: #{tpu_custom_call.1} parent=1 // pred_check_branch
      %185 = sbr.rel (0) target = $region49
    $region48: #{tpu_custom_call.1} parent=1 // pred_region
      %186 = dma.done [#allocation4], 16
    $region49: #{tpu_custom_call.1} parent=1 // pred_fallthru
      _
    %187 = vsyncpa [#allocation3], 1
    %188 = vsyncpa [#allocation6], 1
    %189 = vsyncpa [#allocation9], 1
    %190 = vsyncpa [#allocation4], 1

</llo_original>
